<compile_context>
chip_gen: v5e
topology: v5e:2x2
jax: 0.10.0
libtpu: 0.0.40
codegen_flags: <defaults>
</compile_context>

<pallas_src>
import math

import jax
import jax.numpy as jnp
from jax import lax
from jax.experimental import pallas as pl
from jax.experimental.pallas import tpu as pltpu


def _round_up(a, m):
    return ((a + m - 1) // m) * m


def _round_down(a, m):
    return (a // m) * m


def _critic_kernel(x_ref, w1_ref, b1_ref, w2_ref, b2_ref, o_ref):
    # x_ref : (TG, pack*S)     packed activations (f32/bf16), streamed per tile
    # w1_ref: (pack*S, pack*H) block-diagonal kron(I, fc1.weight.T), resident
    # b1_ref: (pack*H, 1)      tiled fc1 bias (f32), resident
    # w2_ref: (pack, pack*H)   block-diagonal kron(I, fc2.weight), f32, resident
    # b2_ref: (1, 1)           fc2 bias scalar in SMEM
    # o_ref : (1, pack, TG)    lane-dense critic values (f32)

    # Cast the x tile to the MXU dtype *inside* the kernel (no extra HBM pass).
    x = x_ref[...].astype(w1_ref.dtype)

    # fc1, computed transposed on the MXU with the block-diagonal weight:
    #   h_t[p*H + h, g] = sum_s w1[h, s] * x[g*pack + p, s]
    h_t = lax.dot_general(
        w1_ref[...], x,
        dimension_numbers=(((0,), (1,)), ((), ())),
        preferred_element_type=jnp.float32,
    )                                             # (pack*H, TG), f32 accumulate
    h_t = jnp.maximum(h_t + b1_ref[...], 0.0)     # bias (lane-broadcast) + relu, f32

    # fc2 as a second tiny-M MXU matmul (MXU has huge slack; frees VPU/XLU):
    #   out[p, g] = sum_h w2[0, h] * h_t[p*H + h, g]
    out = lax.dot_general(
        w2_ref[...], h_t,
        dimension_numbers=(((1,), (0,)), ((), ())),
        preferred_element_type=jnp.float32,
    )                                             # (pack, TG)
    o_ref[...] = (out + b2_ref[0, 0])[None].astype(o_ref.dtype)


def _choose_pack(B, S):
    """How many consecutive batch rows to fold into the 128-lane axis."""
    if 0 < S <= 128 and 128 % S == 0 and B > 0:
        return max(1, math.gcd(128 // S, B))
    return 1


def _choose_tile(Bg, pack, S, H, target_batch_rows, vmem_budget_bytes):
    """Packed rows per tile: as large as the VMEM budget allows, >=2 tiles if possible."""
    # VMEM bytes per packed row: x double-buffer (f32) + in-kernel bf16 copy
    # + fc1 activation (~2 live f32 copies) + output double-buffer.
    per_row = pack * (S * (2 * 4 + 2) + H * 4 * 2 + 4 * 2)
    tg = min(max(1, target_batch_rows // pack), max(1, vmem_budget_bytes // per_row))
    tg = max(8, _round_down(tg, 8))
    if Bg < 8:
        return Bg                    # single block covering the full (tiny) batch
    # Keep at least 2 tiles when the batch allows so the "parallel" grid axis
    # can be sharded across both TensorCores on v7x.
    return min(tg, _round_up(pl.cdiv(Bg, 2), 8))


def critic_forward(x, w1, b1, w2, b2, *, target_batch_rows=65536, use_bf16=True,
                   vmem_budget_bytes=24 * 1024 * 1024):
    """Forward pass of CriticModel: fc2(relu(fc1(x))).

    x : (B, S) float32 or bfloat16 (kept in its HBM dtype; any cast is in-kernel)
    w1: (H, S) fc1.weight (PyTorch layout), b1: (H,) fc1.bias
    w2: (1, H) fc2.weight (PyTorch layout), b2: (1,) fc2.bias
    returns (B, 1) float32
    """
    B, S = x.shape
    H = w1.shape[0]

    # Lane-dense packing: fold `pack` consecutive batch rows into the 128-lane
    # axis with a free contiguous reshape (no HBM pass over x).
    pack = _choose_pack(B, S)
    Bg = B // pack
    packS = pack * S
    pH = pack * H
    xp = x.reshape(Bg, packS)

    w_dtype = jnp.bfloat16 if use_bf16 else jnp.float32
    eye = jnp.eye(pack, dtype=jnp.float32)
    # Block-diagonal weights so the packed contraction stays per-row correct.
    w1_blk = jnp.kron(eye, w1.astype(jnp.float32).T).astype(w_dtype)    # (packS, pH)
    b1_t = jnp.tile(b1.astype(jnp.float32), pack).reshape(pH, 1)        # (pH, 1)
    w2_blk = jnp.kron(eye, w2.astype(jnp.float32).reshape(1, H))        # (pack, pH), f32
    b2_k = b2.reshape(1, 1).astype(jnp.float32)

    tg = _choose_tile(Bg, pack, S, H, target_batch_rows, vmem_budget_bytes)
    # No jnp.pad: the last (partially OOB) block reads unspecified data, whose
    # rows are independent of valid rows and sliced off below.
    num_tiles = pl.cdiv(Bg, tg)

    out = pl.pallas_call(
        _critic_kernel,
        out_shape=jax.ShapeDtypeStruct((num_tiles, pack, tg), jnp.float32),
        grid=(num_tiles,),
        in_specs=[
            pl.BlockSpec((tg, packS), lambda i: (i, 0)),          # x: streamed per tile
            pl.BlockSpec((packS, pH), lambda i: (0, 0)),          # w1 block-diag: resident
            pl.BlockSpec((pH, 1), lambda i: (0, 0)),              # b1: resident
            pl.BlockSpec((pack, pH), lambda i: (0, 0)),           # w2 block-diag: resident
            pl.BlockSpec(memory_space=pltpu.MemorySpace.SMEM),    # b2: scalar in SMEM
        ],
        out_specs=pl.BlockSpec((1, pack, tg), lambda i: (i, 0, 0)),
        compiler_params=pltpu.CompilerParams(
            dimension_semantics=("parallel",),   # shard batch tiles across TCs (v7x)
            vmem_limit_bytes=48 * 1024 * 1024,   # headroom above the tile VMEM budget
        ),
    )(xp, w1_blk, b1_t, w2_blk, b2_k)

    # out[i, p, g] = value for batch row (i*tg + g)*pack + p -> (B, 1).
    flat = out.transpose(0, 2, 1).reshape(num_tiles * tg * pack)
    return flat[:B].reshape(B, 1)


def init_params(key, state_size, hidden_dim):
    # Deterministic init mirroring nn.Linear's uniform(-1/sqrt(fan_in), 1/sqrt(fan_in)),
    # stored in PyTorch layout: weight (out_features, in_features), bias (out_features,).
    k1, k2, k3, k4 = jax.random.split(key, 4)
    bound1 = 1.0 / float(state_size) ** 0.5
    bound2 = 1.0 / float(hidden_dim) ** 0.5
    w1 = jax.random.uniform(k1, (hidden_dim, state_size), jnp.float32, -bound1, bound1)
    b1 = jax.random.uniform(k2, (hidden_dim,), jnp.float32, -bound1, bound1)
    w2 = jax.random.uniform(k3, (1, hidden_dim), jnp.float32, -bound2, bound2)
    b2 = jax.random.uniform(k4, (1,), jnp.float32, -bound2, bound2)
    return w1, b1, w2, b2


def _reference(x, w1, b1, w2, b2, use_bf16=True):
    # Matches the kernel's numerics: (optionally) bf16-rounded x/w1 with f32
    # accumulation for fc1; fc2 fully in f32.
    if use_bf16:
        x = x.astype(jnp.bfloat16).astype(jnp.float32)
        w1 = w1.astype(jnp.bfloat16).astype(jnp.float32)
    h = jnp.maximum(
        jnp.einsum("bs,hs->bh", x, w1, precision=lax.Precision.HIGHEST) + b1[None, :],
        0.0,
    )
    return h @ w2.T + b2[None, :]


if __name__ == "__main__":
    key = jax.random.PRNGKey(0)
    # (batch, state_representation_size, hidden_dim) -- all small shapes.
    configs = [
        (64, 16, 32),    # packed path (pack=8), single tile
        (200, 16, 32),   # packed path, 2 tiles, partially OOB tail block
        (37, 24, 48),    # unpacked fallback (S does not divide 128), 2 tiles
    ]
    for idx, (batch, state_size, hidden_dim) in enumerate(configs):
        k_x, k_p = jax.random.split(jax.random.fold_in(key, idx))
        x = jax.random.normal(k_x, (batch, state_size), jnp.float32)
        w1, b1, w2, b2 = init_params(k_p, state_size, hidden_dim)

        out = jax.block_until_ready(critic_forward(x, w1, b1, w2, b2))
        assert out.shape == (batch, 1)

        # Numerics-matched reference (bf16-rounded fc1 inputs, f32 accumulate).
        ref = _reference(x, w1, b1, w2, b2, use_bf16=True)
        assert jnp.allclose(out, ref, atol=2e-3, rtol=1e-3), (
            idx, float(jnp.max(jnp.abs(out - ref))))

        # Loose sanity check against the pure-f32 forward (bf16 rounding only).
        ref_f32 = jnp.maximum(x @ w1.T + b1[None, :], 0.0) @ w2.T + b2[None, :]
        assert jnp.allclose(out, ref_f32, atol=1e-1, rtol=1e-1)

    print("KERNEL_OK")
</pallas_src>

<mosaic_0001>
module attributes {stable_mosaic.version = 11 : i64} {
  func.func @_critic_kernel(%arg0: i32, %arg1: memref<8x128xf32, #tpu.memory_space<vmem>>, %arg2: memref<128x256xbf16, #tpu.memory_space<vmem>>, %arg3: memref<256x1xf32, #tpu.memory_space<vmem>>, %arg4: memref<8x256xf32, #tpu.memory_space<vmem>>, %arg5: memref<1x1xf32, #tpu.memory_space<smem>>, %arg6: memref<1x8x8xf32, #tpu.memory_space<vmem>>) attributes {dimension_semantics = [#tpu.dimension_semantics<parallel>], iteration_bounds = array<i64: 1>, scalar_prefetch = 0 : i64, scratch_operands = 0 : i64, tpu.core_type = #tpu.core_type<tc>, window_params = [{transform_indices = @transform_0, window_bounds = array<i64: 8, 128>}, {pipeline_mode = #tpu.pipeline_mode<synchronous>, transform_indices = @transform_1, window_bounds = array<i64: 128, 256>}, {pipeline_mode = #tpu.pipeline_mode<synchronous>, transform_indices = @transform_2, window_bounds = array<i64: 256, 1>}, {pipeline_mode = #tpu.pipeline_mode<synchronous>, transform_indices = @transform_3, window_bounds = array<i64: 8, 256>}, {transform_indices = @transform_4, window_bounds = array<i64: 1, 1>}, {transform_indices = @transform_5, window_bounds = array<i64: 1, 8, 8>}]} {
    %c0 = arith.constant 0 : index
    %c0_0 = arith.constant 0 : index
    %0 = vector.load %arg1[%c0, %c0_0] : memref<8x128xf32, #tpu.memory_space<vmem>>, vector<8x128xf32>
    %1 = arith.truncf %0 : vector<8x128xf32> to vector<8x128xbf16>
    %c0_1 = arith.constant 0 : index
    %c0_2 = arith.constant 0 : index
    %2 = vector.load %arg2[%c0_1, %c0_2] : memref<128x256xbf16, #tpu.memory_space<vmem>>, vector<128x256xbf16>
    %cst = arith.constant dense<0.000000e+00> : vector<256x8xf32>
    %3 = tpu.matmul %2, %1, %cst {dimension_numbers = #tpu.dot_dimension_numbers<[0], [1], [1], [0], [0, 1, 1, 0], [], []>} : vector<128x256xbf16>, vector<8x128xbf16>, vector<256x8xf32> -> vector<256x8xf32>
    %c0_3 = arith.constant 0 : index
    %c0_4 = arith.constant 0 : index
    %4 = vector.load %arg3[%c0_3, %c0_4] : memref<256x1xf32, #tpu.memory_space<vmem>>, vector<256x1xf32>
    %5 = vector.broadcast %4 : vector<256x1xf32> to vector<256x8xf32>
    %6 = arith.addf %3, %5 : vector<256x8xf32>
    %cst_5 = arith.constant 0.000000e+00 : f32
    %7 = vector.broadcast %cst_5 : f32 to vector<256x8xf32>
    %8 = arith.maximumf %6, %7 : vector<256x8xf32>
    %c0_6 = arith.constant 0 : index
    %c0_7 = arith.constant 0 : index
    %9 = vector.load %arg4[%c0_6, %c0_7] : memref<8x256xf32, #tpu.memory_space<vmem>>, vector<8x256xf32>
    %cst_8 = arith.constant dense<0.000000e+00> : vector<8x8xf32>
    %10 = tpu.matmul %9, %8, %cst_8 {dimension_numbers = #tpu.dot_dimension_numbers<[1], [0], [0], [1], [0, 0, 1, 1], [], []>} : vector<8x256xf32>, vector<256x8xf32>, vector<8x8xf32> -> vector<8x8xf32>
    %c0_9 = arith.constant 0 : index
    %c0_10 = arith.constant 0 : index
    %11 = memref.load %arg5[%c0_9, %c0_10] : memref<1x1xf32, #tpu.memory_space<smem>>
    %12 = vector.broadcast %11 : f32 to vector<8x8xf32>
    %13 = arith.addf %10, %12 : vector<8x8xf32>
    %14 = vector.shape_cast %13 : vector<8x8xf32> to vector<1x8x8xf32>
    %c0_11 = arith.constant 0 : index
    %c0_12 = arith.constant 0 : index
    %c0_13 = arith.constant 0 : index
    %15 = vector.load %arg6[%c0_11, %c0_12, %c0_13] : memref<1x8x8xf32, #tpu.memory_space<vmem>>, vector<1x8x8xf32>
    tpu.vector_store %arg6[%c0_11, %c0_12, %c0_13], %14 {strides = array<i32>} : memref<1x8x8xf32, #tpu.memory_space<vmem>>, vector<1x8x8xf32>,
    return
  }
  func.func @transform_0(%arg0: i32) -> (i32, i32) {
    %c0_i32 = arith.constant 0 : i32
    %c0_i32_0 = arith.constant 0 : i32
    return %arg0, %c0_i32 : i32, i32
  }
  func.func @transform_1(%arg0: i32) -> (i32, i32) {
    %c0_i32 = arith.constant 0 : i32
    %c0_i32_0 = arith.constant 0 : i32
    %c0_i32_1 = arith.constant 0 : i32
    return %c0_i32, %c0_i32_0 : i32, i32
  }
  func.func @transform_2(%arg0: i32) -> (i32, i32) {
    %c0_i32 = arith.constant 0 : i32
    %c0_i32_0 = arith.constant 0 : i32
    %c0_i32_1 = arith.constant 0 : i32
    return %c0_i32, %c0_i32_0 : i32, i32
  }
  func.func @transform_3(%arg0: i32) -> (i32, i32) {
    %c0_i32 = arith.constant 0 : i32
    %c0_i32_0 = arith.constant 0 : i32
    %c0_i32_1 = arith.constant 0 : i32
    return %c0_i32, %c0_i32_0 : i32, i32
  }
  func.func @transform_4(%arg0: i32) -> (i32, i32) {
    %c0_i32 = arith.constant 0 : i32
    %c0_i32_0 = arith.constant 0 : i32
    %c0_i32_1 = arith.constant 0 : i32
    return %c0_i32, %c0_i32_0 : i32, i32
  }
  func.func @transform_5(%arg0: i32) -> (i32, i32, i32) {
    %c0_i32 = arith.constant 0 : i32
    %c0_i32_0 = arith.constant 0 : i32
    %c0_i32_1 = arith.constant 0 : i32
    return %arg0, %c0_i32, %c0_i32_0 : i32, i32, i32
  }
}

</mosaic_0001>

<llo_original>
// kernel: tpu_custom_call.1
$region0: #{tpu_custom_call.1}
  #allocation0 [shape = 'u32[]', space=smem, size = 0x4, offset = 0x4, fixed_abs, tag = 'smem constant byte address 0x4 - core index']
  #allocation1 [shape = 'u32[72,128]{1,0:T(1,128)}', space=vmem, size = 0x9000, scoped, tag = 'internal scratch']
  #allocation2 [shape = 'f32[1,1]{1,0:T(1,128)S(6)}', space=smem, size = 0x200, scoped, tag = 'scoped memory for tpu_custom_call.1']
  %s0 = inlined_call_operand.vmem [shape: f32[8,128], index: 0, kind: input, shape index: {}]
  %s1 = inlined_call_operand.vmem [shape: bf16[128,256], index: 1, kind: input, shape index: {}]
  %s2 = inlined_call_operand.vmem [shape: f32[256,1], index: 2, kind: input, shape index: {}]
  %s3 = inlined_call_operand.vmem [shape: f32[8,256], index: 3, kind: input, shape index: {}]
  %s4 = inlined_call_operand.<no memory space> [shape: f32[1,1], index: 4, kind: input, shape index: {}]
  %s5 = inlined_call_operand.hbm [shape: f32[1,8,8], index: 5, kind: output, shape index: {}]
  %s6 = sld [smem:[#allocation0]]
  $region30: #{tpu_custom_call.1} parent=0
    _
  %s8 = ssub.s32 1, %s6
  %s9 = scalar_select 0, %s8, %s6
  %10 = sst [smem:[#allocation2]] %s4
  $region1: #{tpu_custom_call.1} parent=0
    #allocation3 [shape = 'u8[4096]{0}', space=vmem, size = 0x1000, scoped, tag = 'output window, operand 0, single buffered']
    #allocation4 [shape = 's32[1]{0}', space=sflag, size = 0x4, scoped, tag = 'scoped memory for tpu_custom_call.1']
    %11 = vsyncpa [#allocation4], 0
    // Predicated region
    $region2: #{tpu_custom_call.1} parent=1 // pred_check
      _
    $region3: #{tpu_custom_call.1} parent=1 // pred_check_branch
      %13 = sbr.rel (0) target = $region5
    $region4: #{tpu_custom_call.1} parent=1 // pred_region
      _
    $region5: #{tpu_custom_call.1} parent=1 // pred_fallthru
      _
    // Predicated region
    $region6: #{tpu_custom_call.1} parent=1 // pred_check
      _
    $region7: #{tpu_custom_call.1} parent=1 // pred_check_branch
      %15 = sbr.rel (0) target = $region9
    $region8: #{tpu_custom_call.1} parent=1 // pred_region
      _
    $region9: #{tpu_custom_call.1} parent=1 // pred_fallthru
      _
    // Predicated region
    $region10: #{tpu_custom_call.1} parent=1 // pred_check
      _
    $region11: #{tpu_custom_call.1} parent=1 // pred_check_branch
      %17 = sbr.rel (0) target = $region13
    $region12: #{tpu_custom_call.1} parent=1 // pred_region
      _
    $region13: #{tpu_custom_call.1} parent=1 // pred_fallthru
      _
    // Predicated region
    $region14: #{tpu_custom_call.1} parent=1 // pred_check
      _
    $region15: #{tpu_custom_call.1} parent=1 // pred_check_branch
      %19 = sbr.rel (0) target = $region17
    $region16: #{tpu_custom_call.1} parent=1 // pred_region
      _
    $region17: #{tpu_custom_call.1} parent=1 // pred_fallthru
      _
    // Predicated region
    $region18: #{tpu_custom_call.1} parent=1 // pred_check
      _
    $region19: #{tpu_custom_call.1} parent=1 // pred_check_branch
      %21 = sbr.rel (0) target = $region21
    $region20: #{tpu_custom_call.1} parent=1 // pred_region
      _
    $region21: #{tpu_custom_call.1} parent=1 // pred_fallthru
      _
    %v23 = vld [vmem:[%s0] sm:$0xff]
    %v24 = vpack.c.bf16 %v23, %v23
    %v25 = vld [vmem:[%s1] sm:$0xff]
    %v26 = vld [vmem:[%s1 + $0x8] sm:$0xff]
    %v27 = vld [vmem:[%s1 + $0x10] sm:$0xff]
    %v28 = vld [vmem:[%s1 + $0x18] sm:$0xff]
    %v29 = vld [vmem:[%s1 + $0x20] sm:$0xff]
    %v30 = vld [vmem:[%s1 + $0x28] sm:$0xff]
    %v31 = vld [vmem:[%s1 + $0x30] sm:$0xff]
    %v32 = vld [vmem:[%s1 + $0x38] sm:$0xff]
    %v33 = vld [vmem:[%s1 + $0x40] sm:$0xff]
    %v34 = vld [vmem:[%s1 + $0x48] sm:$0xff]
    %v35 = vld [vmem:[%s1 + $0x50] sm:$0xff]
    %v36 = vld [vmem:[%s1 + $0x58] sm:$0xff]
    %v37 = vld [vmem:[%s1 + $0x60] sm:$0xff]
    %v38 = vld [vmem:[%s1 + $0x68] sm:$0xff]
    %v39 = vld [vmem:[%s1 + $0x70] sm:$0xff]
    %v40 = vld [vmem:[%s1 + $0x78] sm:$0xff]
    %v41 = vld [vmem:[%s2] sm:$0xff]
    %v42 = vld [vmem:[%s2 + $0x8] sm:$0xff]
    %v43 = vld [vmem:[%s2 + $0x10] sm:$0xff]
    %v44 = vld [vmem:[%s2 + $0x18] sm:$0xff]
    %v45 = vld [vmem:[%s2 + $0x20] sm:$0xff]
    %v46 = vld [vmem:[%s2 + $0x28] sm:$0xff]
    %v47 = vld [vmem:[%s2 + $0x30] sm:$0xff]
    %v48 = vld [vmem:[%s2 + $0x38] sm:$0xff]
    %v49 = vld [vmem:[%s2 + $0x40] sm:$0xff]
    %v50 = vld [vmem:[%s2 + $0x48] sm:$0xff]
    %v51 = vld [vmem:[%s2 + $0x50] sm:$0xff]
    %v52 = vld [vmem:[%s2 + $0x58] sm:$0xff]
    %v53 = vld [vmem:[%s2 + $0x60] sm:$0xff]
    %v54 = vld [vmem:[%s2 + $0x68] sm:$0xff]
    %v55 = vld [vmem:[%s2 + $0x70] sm:$0xff]
    %v56 = vld [vmem:[%s2 + $0x78] sm:$0xff]
    %v57 = vld [vmem:[%s2 + $0x80] sm:$0xff]
    %v58 = vld [vmem:[%s2 + $0x88] sm:$0xff]
    %v59 = vld [vmem:[%s2 + $0x90] sm:$0xff]
    %v60 = vld [vmem:[%s2 + $0x98] sm:$0xff]
    %v61 = vld [vmem:[%s2 + $0xa0] sm:$0xff]
    %v62 = vld [vmem:[%s2 + $0xa8] sm:$0xff]
    %v63 = vld [vmem:[%s2 + $0xb0] sm:$0xff]
    %v64 = vld [vmem:[%s2 + $0xb8] sm:$0xff]
    %v65 = vld [vmem:[%s2 + $0xc0] sm:$0xff]
    %v66 = vld [vmem:[%s2 + $0xc8] sm:$0xff]
    %v67 = vld [vmem:[%s2 + $0xd0] sm:$0xff]
    %v68 = vld [vmem:[%s2 + $0xd8] sm:$0xff]
    %v69 = vld [vmem:[%s2 + $0xe0] sm:$0xff]
    %v70 = vld [vmem:[%s2 + $0xe8] sm:$0xff]
    %v71 = vld [vmem:[%s2 + $0xf0] sm:$0xff]
    %v72 = vld [vmem:[%s2 + $0xf8] sm:$0xff]
    %74 = vset.pattern.permute.xlu0 0
    %75 = vperm.xlu0 %74, %v41
    %v76 = vpop.permute.xlu0 %75
    %79 = vset.pattern.permute.xlu0 0
    %80 = vperm.xlu0 %79, %v42
    %v81 = vpop.permute.xlu0 %80
    %84 = vset.pattern.permute.xlu0 0
    %85 = vperm.xlu0 %84, %v43
    %v86 = vpop.permute.xlu0 %85
    %89 = vset.pattern.permute.xlu0 0
    %90 = vperm.xlu0 %89, %v44
    %v91 = vpop.permute.xlu0 %90
    %94 = vset.pattern.permute.xlu0 0
    %95 = vperm.xlu0 %94, %v45
    %v96 = vpop.permute.xlu0 %95
    %99 = vset.pattern.permute.xlu0 0
    %100 = vperm.xlu0 %99, %v46
    %v101 = vpop.permute.xlu0 %100
    %104 = vset.pattern.permute.xlu0 0
    %105 = vperm.xlu0 %104, %v47
    %v106 = vpop.permute.xlu0 %105
    %109 = vset.pattern.permute.xlu0 0
    %110 = vperm.xlu0 %109, %v48
    %v111 = vpop.permute.xlu0 %110
    %114 = vset.pattern.permute.xlu0 0
    %115 = vperm.xlu0 %114, %v49
    %v116 = vpop.permute.xlu0 %115
    %119 = vset.pattern.permute.xlu0 0
    %120 = vperm.xlu0 %119, %v50
    %v121 = vpop.permute.xlu0 %120
    %124 = vset.pattern.permute.xlu0 0
    %125 = vperm.xlu0 %124, %v51
    %v126 = vpop.permute.xlu0 %125
    %129 = vset.pattern.permute.xlu0 0
    %130 = vperm.xlu0 %129, %v52
    %v131 = vpop.permute.xlu0 %130
    %134 = vset.pattern.permute.xlu0 0
    %135 = vperm.xlu0 %134, %v53
    %v136 = vpop.permute.xlu0 %135
    %139 = vset.pattern.permute.xlu0 0
    %140 = vperm.xlu0 %139, %v54
    %v141 = vpop.permute.xlu0 %140
    %144 = vset.pattern.permute.xlu0 0
    %145 = vperm.xlu0 %144, %v55
    %v146 = vpop.permute.xlu0 %145
    %149 = vset.pattern.permute.xlu0 0
    %150 = vperm.xlu0 %149, %v56
    %v151 = vpop.permute.xlu0 %150
    %154 = vset.pattern.permute.xlu0 0
    %155 = vperm.xlu0 %154, %v57
    %v156 = vpop.permute.xlu0 %155
    %159 = vset.pattern.permute.xlu0 0
    %160 = vperm.xlu0 %159, %v58
    %v161 = vpop.permute.xlu0 %160
    %164 = vset.pattern.permute.xlu0 0
    %165 = vperm.xlu0 %164, %v59
    %v166 = vpop.permute.xlu0 %165
    %169 = vset.pattern.permute.xlu0 0
    %170 = vperm.xlu0 %169, %v60
    %v171 = vpop.permute.xlu0 %170
    %174 = vset.pattern.permute.xlu0 0
    %175 = vperm.xlu0 %174, %v61
    %v176 = vpop.permute.xlu0 %175
    %179 = vset.pattern.permute.xlu0 0
    %180 = vperm.xlu0 %179, %v62
    %v181 = vpop.permute.xlu0 %180
    %184 = vset.pattern.permute.xlu0 0
    %185 = vperm.xlu0 %184, %v63
    %v186 = vpop.permute.xlu0 %185
    %189 = vset.pattern.permute.xlu0 0
    %190 = vperm.xlu0 %189, %v64
    %v191 = vpop.permute.xlu0 %190
    %194 = vset.pattern.permute.xlu0 0
    %195 = vperm.xlu0 %194, %v65
    %v196 = vpop.permute.xlu0 %195
    %199 = vset.pattern.permute.xlu0 0
    %200 = vperm.xlu0 %199, %v66
    %v201 = vpop.permute.xlu0 %200
    %204 = vset.pattern.permute.xlu0 0
    %205 = vperm.xlu0 %204, %v67
    %v206 = vpop.permute.xlu0 %205
    %209 = vset.pattern.permute.xlu0 0
    %210 = vperm.xlu0 %209, %v68
    %v211 = vpop.permute.xlu0 %210
    %214 = vset.pattern.permute.xlu0 0
    %215 = vperm.xlu0 %214, %v69
    %v216 = vpop.permute.xlu0 %215
    %219 = vset.pattern.permute.xlu0 0
    %220 = vperm.xlu0 %219, %v70
    %v221 = vpop.permute.xlu0 %220
    %224 = vset.pattern.permute.xlu0 0
    %225 = vperm.xlu0 %224, %v71
    %v226 = vpop.permute.xlu0 %225
    %229 = vset.pattern.permute.xlu0 0
    %230 = vperm.xlu0 %229, %v72
    %v231 = vpop.permute.xlu0 %230
    %v249 = vunpack.c.l.b16 %v25
    %v250 = vunpack.c.h.b16 %v25
    %v251 = vunpack.c.l.b16 %v26
    %v252 = vunpack.c.h.b16 %v26
    %v253 = vunpack.c.l.b16 %v27
    %v254 = vunpack.c.h.b16 %v27
    %v255 = vunpack.c.l.b16 %v28
    %v256 = vunpack.c.h.b16 %v28
    %v257 = vunpack.c.l.b16 %v29
    %v258 = vunpack.c.h.b16 %v29
    %v259 = vunpack.c.l.b16 %v30
    %v260 = vunpack.c.h.b16 %v30
    %v261 = vunpack.c.l.b16 %v31
    %v262 = vunpack.c.h.b16 %v31
    %v263 = vunpack.c.l.b16 %v32
    %v264 = vunpack.c.h.b16 %v32
    %v265 = vunpack.c.l.b16 %v33
    %v266 = vunpack.c.h.b16 %v33
    %v267 = vunpack.c.l.b16 %v34
    %v268 = vunpack.c.h.b16 %v34
    %v269 = vunpack.c.l.b16 %v35
    %v270 = vunpack.c.h.b16 %v35
    %v271 = vunpack.c.l.b16 %v36
    %v272 = vunpack.c.h.b16 %v36
    %v273 = vunpack.c.l.b16 %v37
    %v274 = vunpack.c.h.b16 %v37
    %v275 = vunpack.c.l.b16 %v38
    %v276 = vunpack.c.h.b16 %v38
    %v277 = vunpack.c.l.b16 %v39
    %v278 = vunpack.c.h.b16 %v39
    %v279 = vunpack.c.l.b16 %v40
    %v280 = vunpack.c.h.b16 %v40
    %v281 = vpack.c.b16 %v251, %v249
    %v282 = vpack.c.b16 %v252, %v250
    %v283 = vpack.c.b16 %v255, %v253
    %v284 = vpack.c.b16 %v256, %v254
    %v285 = vpack.c.b16 %v259, %v257
    %v286 = vpack.c.b16 %v260, %v258
    %v287 = vpack.c.b16 %v263, %v261
    %v288 = vpack.c.b16 %v264, %v262
    %v289 = vpack.c.b16 %v267, %v265
    %v290 = vpack.c.b16 %v268, %v266
    %v291 = vpack.c.b16 %v271, %v269
    %v292 = vpack.c.b16 %v272, %v270
    %v293 = vpack.c.b16 %v275, %v273
    %v294 = vpack.c.b16 %v276, %v274
    %v295 = vpack.c.b16 %v279, %v277
    %v296 = vpack.c.b16 %v280, %v278
    %313 = vxpose.binary.xlu0.c.b16.start [1/16] %v282, %v281, 128
    %314 = vxpose.binary.xlu0.c.b16.cont [2/16] %v284, %v283, 128
    %315 = vxpose.binary.xlu0.c.b16.cont [3/16] %v286, %v285, 128
    %316 = vxpose.binary.xlu0.c.b16.cont [4/16] %v288, %v287, 128
    %317 = vxpose.binary.xlu0.c.b16.cont [5/16] %v290, %v289, 128
    %318 = vxpose.binary.xlu0.c.b16.cont [6/16] %v292, %v291, 128
    %319 = vxpose.binary.xlu0.c.b16.cont [7/16] %v294, %v293, 128
    %320 = vxpose.binary.xlu0.c.b16.end [8/16] %v296, %v295, 128
    %v321 = vpop.trf.xlu0
    %v322 = vpop.trf.xlu0
    %v323 = vpop.trf.xlu0
    %v324 = vpop.trf.xlu0
    %v325 = vpop.trf.xlu0
    %v326 = vpop.trf.xlu0
    %v327 = vpop.trf.xlu0
    %v328 = vpop.trf.xlu0
    %v329 = vpop.trf.xlu0
    %v330 = vpop.trf.xlu0
    %v331 = vpop.trf.xlu0
    %v332 = vpop.trf.xlu0
    %v333 = vpop.trf.xlu0
    %v334 = vpop.trf.xlu0
    %v335 = vpop.trf.xlu0
    %v336 = vpop.trf.xlu0
    %337 = vmatpush.bf16.xpose.msra.mxu0 0
    %338 = vmatpush.bf16.xpose.msra.mxu0 0
    %339 = vmatpush.bf16.xpose.msra.mxu0 0
    %340 = vmatpush.bf16.xpose.msra.mxu0 0
    %341 = vmatpush.bf16.xpose.msra.mxu0 0
    %342 = vmatpush.bf16.xpose.msra.mxu0 0
    %343 = vmatpush.bf16.xpose.msra.mxu0 0
    %344 = vmatpush.bf16.xpose.msra.mxu0 %v24
    %345 = vmatmul.bf16.gmra.mxu0 %v321
    %v346 = vpop.f32.mrf.mxu0
    %v347 = vadd.f32 %v76, %v346
    %v348 = vpop.f32.mrf.mxu0
    %v349 = vadd.f32 %v81, %v348
    %350 = vmatmul.bf16.gmra.mxu0 %v323
    %v351 = vpop.f32.mrf.mxu0
    %v352 = vadd.f32 %v86, %v351
    %v353 = vpop.f32.mrf.mxu0
    %v354 = vadd.f32 %v91, %v353
    %355 = vmatmul.bf16.gmra.mxu0 %v325
    %v356 = vpop.f32.mrf.mxu0
    %v357 = vadd.f32 %v96, %v356
    %v358 = vpop.f32.mrf.mxu0
    %v359 = vadd.f32 %v101, %v358
    %360 = vmatmul.bf16.gmra.mxu0 %v327
    %v361 = vpop.f32.mrf.mxu0
    %v362 = vadd.f32 %v106, %v361
    %v363 = vpop.f32.mrf.mxu0
    %v364 = vadd.f32 %v111, %v363
    %365 = vmatmul.bf16.gmra.mxu0 %v329
    %v366 = vpop.f32.mrf.mxu0
    %v367 = vadd.f32 %v116, %v366
    %v368 = vpop.f32.mrf.mxu0
    %v369 = vadd.f32 %v121, %v368
    %370 = vmatmul.bf16.gmra.mxu0 %v331
    %v371 = vpop.f32.mrf.mxu0
    %v372 = vadd.f32 %v126, %v371
    %v373 = vpop.f32.mrf.mxu0
    %v374 = vadd.f32 %v131, %v373
    %375 = vmatmul.bf16.gmra.mxu0 %v333
    %v376 = vpop.f32.mrf.mxu0
    %v377 = vadd.f32 %v136, %v376
    %v378 = vpop.f32.mrf.mxu0
    %v379 = vadd.f32 %v141, %v378
    %380 = vmatmul.bf16.gmra.mxu0 %v335
    %v381 = vpop.f32.mrf.mxu0
    %v382 = vadd.f32 %v146, %v381
    %v383 = vpop.f32.mrf.mxu0
    %v384 = vadd.f32 %v151, %v383
    %385 = vmatmul.bf16.gmra.mxu0 %v322
    %v386 = vpop.f32.mrf.mxu0
    %v387 = vadd.f32 %v156, %v386
    %v388 = vpop.f32.mrf.mxu0
    %v389 = vadd.f32 %v161, %v388
    %390 = vmatmul.bf16.gmra.mxu0 %v324
    %v391 = vpop.f32.mrf.mxu0
    %v392 = vadd.f32 %v166, %v391
    %v393 = vpop.f32.mrf.mxu0
    %v394 = vadd.f32 %v171, %v393
    %395 = vmatmul.bf16.gmra.mxu0 %v326
    %v396 = vpop.f32.mrf.mxu0
    %v397 = vadd.f32 %v176, %v396
    %v398 = vpop.f32.mrf.mxu0
    %v399 = vadd.f32 %v181, %v398
    %400 = vmatmul.bf16.gmra.mxu0 %v328
    %v401 = vpop.f32.mrf.mxu0
    %v402 = vadd.f32 %v186, %v401
    %v403 = vpop.f32.mrf.mxu0
    %v404 = vadd.f32 %v191, %v403
    %405 = vmatmul.bf16.gmra.mxu0 %v330
    %v406 = vpop.f32.mrf.mxu0
    %v407 = vadd.f32 %v196, %v406
    %v408 = vpop.f32.mrf.mxu0
    %v409 = vadd.f32 %v201, %v408
    %410 = vmatmul.bf16.gmra.mxu0 %v332
    %v411 = vpop.f32.mrf.mxu0
    %v412 = vadd.f32 %v206, %v411
    %v413 = vpop.f32.mrf.mxu0
    %v414 = vadd.f32 %v211, %v413
    %415 = vmatmul.bf16.gmra.mxu0 %v334
    %v416 = vpop.f32.mrf.mxu0
    %v417 = vadd.f32 %v216, %v416
    %v418 = vpop.f32.mrf.mxu0
    %v419 = vadd.f32 %v221, %v418
    %420 = vmatmul.bf16.gmra.mxu0 %v336
    %v421 = vpop.f32.mrf.mxu0
    %v422 = vadd.f32 %v226, %v421
    %v423 = vpop.f32.mrf.mxu0
    %v424 = vadd.f32 %v231, %v423
    %425 = vdwg.mxu0
    %v426 = vmax.f32 %v347, 0.0
    %v427 = vmax.f32 %v349, 0.0
    %v428 = vmax.f32 %v352, 0.0
    %v429 = vmax.f32 %v354, 0.0
    %v430 = vmax.f32 %v357, 0.0
    %v431 = vmax.f32 %v359, 0.0
    %v432 = vmax.f32 %v362, 0.0
    %v433 = vmax.f32 %v364, 0.0
    %v434 = vmax.f32 %v367, 0.0
    %v435 = vmax.f32 %v369, 0.0
    %v436 = vmax.f32 %v372, 0.0
    %v437 = vmax.f32 %v374, 0.0
    %v438 = vmax.f32 %v377, 0.0
    %v439 = vmax.f32 %v379, 0.0
    %v440 = vmax.f32 %v382, 0.0
    %v441 = vmax.f32 %v384, 0.0
    %v442 = vmax.f32 %v387, 0.0
    %v443 = vmax.f32 %v389, 0.0
    %v444 = vmax.f32 %v392, 0.0
    %v445 = vmax.f32 %v394, 0.0
    %v446 = vmax.f32 %v397, 0.0
    %v447 = vmax.f32 %v399, 0.0
    %v448 = vmax.f32 %v402, 0.0
    %v449 = vmax.f32 %v404, 0.0
    %v450 = vmax.f32 %v407, 0.0
    %v451 = vmax.f32 %v409, 0.0
    %v452 = vmax.f32 %v412, 0.0
    %v453 = vmax.f32 %v414, 0.0
    %v454 = vmax.f32 %v417, 0.0
    %v455 = vmax.f32 %v419, 0.0
    %v456 = vmax.f32 %v422, 0.0
    %v457 = vmax.f32 %v424, 0.0
    %v458 = vld [vmem:[%s3] sm:$0xff]
    %v459 = vld [vmem:[%s3 + $0x8] sm:$0xff]
    %s460 = sld [smem:[#allocation2]]
    %v461 = vstv %s460
    %462 = vmatpush.msra.mxu0 %v441
    %463 = vmatpush.msra.mxu0 %v440
    %464 = vmatpush.msra.mxu0 %v439
    %465 = vmatpush.msra.mxu0 %v438
    %466 = vmatpush.msra.mxu0 %v437
    %467 = vmatpush.msra.mxu0 %v436
    %468 = vmatpush.msra.mxu0 %v435
    %469 = vmatpush.msra.mxu0 %v434
    %470 = vmatpush.msra.mxu0 %v433
    %471 = vmatpush.msra.mxu0 %v432
    %472 = vmatpush.msra.mxu0 %v431
    %473 = vmatpush.msra.mxu0 %v430
    %474 = vmatpush.msra.mxu0 %v429
    %475 = vmatpush.msra.mxu0 %v428
    %476 = vmatpush.msra.mxu0 %v427
    %477 = vmatpush.msra.mxu0 %v426
    %478 = vmatmul.f32.gmra.mxu0 %v458
    %v479 = vpop.f32.mrf.mxu0
    %v480 = vadd.f32 %v461, %v479
    %481 = vdwg.mxu0
    %482 = vmatpush.msra.mxu0 %v457
    %483 = vmatpush.msra.mxu0 %v456
    %484 = vmatpush.msra.mxu0 %v455
    %485 = vmatpush.msra.mxu0 %v454
    %486 = vmatpush.msra.mxu0 %v453
    %487 = vmatpush.msra.mxu0 %v452
    %488 = vmatpush.msra.mxu0 %v451
    %489 = vmatpush.msra.mxu0 %v450
    %490 = vmatpush.msra.mxu0 %v449
    %491 = vmatpush.msra.mxu0 %v448
    %492 = vmatpush.msra.mxu0 %v447
    %493 = vmatpush.msra.mxu0 %v446
    %494 = vmatpush.msra.mxu0 %v445
    %495 = vmatpush.msra.mxu0 %v444
    %496 = vmatpush.msra.mxu0 %v443
    %497 = vmatpush.msra.mxu0 %v442
    %498 = vmatmul.f32.gmra.mxu0 %v459
    %v499 = vpop.f32.mrf.mxu0
    %v500 = vadd.f32 %v480, %v499
    %501 = vdwg.mxu0
    %vm502 = vcmask 64512
    %503 = vst.msk [vmem:[#allocation3] sm:$0xff] %vm502, %v500
    // Predicated region
    $region22: #{tpu_custom_call.1} parent=1 // pred_check
      _
    $region23: #{tpu_custom_call.1} parent=1 // pred_check_branch
      %505 = sbr.rel (0) target = $region25
    $region24: #{tpu_custom_call.1} parent=1 // pred_region
      %507 = vsyncadd [#allocation4], 0
      %s509 = sshll.u32 [#allocation3], 4
      %s510 = int_to_ptr.vmem [resolvable:$true] %s509
      %s511 = sshll.u32 %s5, 4
      %s512 = int_to_ptr.hbm [resolvable:$true] %s511
      %514 = dma.vmem_to_hbm [thread:$0]  %s510, 128, %s512, [#allocation4]
    $region25: #{tpu_custom_call.1} parent=1 // pred_fallthru
      _
    // Predicated region
    $region26: #{tpu_custom_call.1} parent=1 // pred_check
      _
    $region27: #{tpu_custom_call.1} parent=1 // pred_check_branch
      %516 = sbr.rel (0) target = $region29
    $region28: #{tpu_custom_call.1} parent=1 // pred_region
      %518 = dma.done [#allocation4], 128
    $region29: #{tpu_custom_call.1} parent=1 // pred_fallthru
      _
    %519 = vsyncpa [#allocation4], 1

</llo_original>
